<compile_context>
chip_gen: v6e
topology: v6e:2x2x1
jax: 0.10.0
libtpu: 0.0.40
codegen_flags: <defaults>
</compile_context>

<pallas_src>
import functools

import jax
import jax.numpy as jnp
from jax.experimental import pallas as pl
from jax.experimental.pallas import tpu as pltpu

LEAKY_SLOPE = 0.01  # nn.LeakyReLU() default negative_slope


def _encoder_kernel(*refs, dropout_rate, eps, apply_dropout):
    if apply_dropout:
        x_ref, u_ref, w1_ref, p_ref, wh_ref, bh_ref, out_ref = refs
    else:
        x_ref, w1_ref, p_ref, wh_ref, bh_ref, out_ref = refs
        u_ref = None

    x = x_ref[...].astype(jnp.float32)

    # --- dropout (inverted scaling, like F.dropout with training=True) ---
    if apply_dropout:
        inv_keep = jnp.float32(1.0 / (1.0 - dropout_rate))
        x = jnp.where(u_ref[...] >= jnp.float32(dropout_rate), x * inv_keep,
                      jnp.float32(0.0))

    # --- fc1 + LeakyReLU ---
    # p_ref rows: 0 = b1, 1 = ln_gamma, 2 = ln_beta  (each [1, 40])
    h = jnp.dot(x, w1_ref[...], preferred_element_type=jnp.float32) + p_ref[0:1, :]
    h = jnp.where(h >= 0.0, h, LEAKY_SLOPE * h)

    # --- LayerNorm(40, eps): biased variance via one-pass E[h^2] - mean^2 ---
    mean = jnp.mean(h, axis=-1, keepdims=True)
    m2 = jnp.mean(h * h, axis=-1, keepdims=True)
    var = m2 - mean * mean
    hn = (h - mean) * jax.lax.rsqrt(var + jnp.float32(eps))
    hn = hn * p_ref[1:2, :] + p_ref[2:3, :]

    # --- fused heads: one dot producing [B, 2*latent] = [mu | logvar] ---
    out_ref[...] = (jnp.dot(hn, wh_ref[...], preferred_element_type=jnp.float32)
                    + bh_ref[...])


def encoder_forward(params, x, *, dropout_rate, eps=0.1, training=True, rng=None):
    """Runs the fused Encoder forward pass. Returns (mu, logvar)."""
    B, _ = x.shape
    latent_dim = params["wmu"].shape[1]
    apply_dropout = bool(training) and float(dropout_rate) > 0.0

    # Pack small params: [3, 40] (b1, gamma, beta) and fused head weight/bias.
    p_small = jnp.concatenate(
        [params["b1"], params["ln_gamma"], params["ln_beta"]], axis=0)      # [3, H]
    w_head = jnp.concatenate([params["wmu"], params["wlv"]], axis=1)        # [H, 2L]
    b_head = jnp.concatenate([params["bmu"], params["blv"]], axis=1)        # [1, 2L]

    kernel = functools.partial(
        _encoder_kernel,
        dropout_rate=float(dropout_rate),
        eps=float(eps),
        apply_dropout=apply_dropout,
    )

    vmem = pl.BlockSpec(memory_space=pltpu.MemorySpace.VMEM)
    args = [x.astype(jnp.float32)]
    if apply_dropout:
        if rng is None:
            rng = jax.random.PRNGKey(0)
        u = jax.random.uniform(rng, x.shape, jnp.float32)  # uniform in [0, 1)
        args.append(u)
    args += [params["w1"], p_small, w_head, b_head]

    out = pl.pallas_call(
        kernel,
        out_shape=jax.ShapeDtypeStruct((B, 2 * latent_dim), jnp.float32),
        in_specs=[vmem] * len(args),
        out_specs=vmem,
    )(*args)

    mu = out[:, :latent_dim]
    logvar = out[:, latent_dim:]
    return mu, logvar


def init_params(key, input_dim, latent_dim, hidden=40):
    """Deterministic synthetic parameters (PyTorch-like uniform fan-in init)."""
    k1, k2, k3, k4, k5, k6 = jax.random.split(key, 6)

    def lin(kw, kb, fan_in, fan_out):
        bound = 1.0 / jnp.sqrt(jnp.float32(fan_in))
        w = jax.random.uniform(kw, (fan_in, fan_out), jnp.float32, -bound, bound)
        b = jax.random.uniform(kb, (1, fan_out), jnp.float32, -bound, bound)
        return w, b

    w1, b1 = lin(k1, k2, input_dim, hidden)
    wmu, bmu = lin(k3, k4, hidden, latent_dim)
    wlv, blv = lin(k5, k6, hidden, latent_dim)
    return {
        "w1": w1, "b1": b1,
        "ln_gamma": jnp.ones((1, hidden), jnp.float32),  # nn.LayerNorm default affine
        "ln_beta": jnp.zeros((1, hidden), jnp.float32),
        "wmu": wmu, "bmu": bmu,
        "wlv": wlv, "blv": blv,
    }


if __name__ == "__main__":
    key = jax.random.PRNGKey(0)
    kp, kx, kd = jax.random.split(key, 3)

    batch = 8
    input_dim = 32
    latent_dim = 8

    params = init_params(kp, input_dim, latent_dim)
    x = jax.random.normal(kx, (batch, input_dim), jnp.float32)

    mu, logvar = encoder_forward(
        params, x, dropout_rate=0.5, eps=0.1, training=True, rng=kd
    )
    jax.block_until_ready((mu, logvar))

    assert mu.shape == (batch, latent_dim) and logvar.shape == (batch, latent_dim)
    assert bool(jnp.all(jnp.isfinite(mu))) and bool(jnp.all(jnp.isfinite(logvar)))

    # Also exercise the eval path (no dropout branch compiled into the kernel).
    mu_e, logvar_e = encoder_forward(
        params, x, dropout_rate=0.5, eps=0.1, training=False
    )
    jax.block_until_ready((mu_e, logvar_e))

    print("KERNEL_OK")
</pallas_src>

<mosaic_0001>
module attributes {stable_mosaic.version = 11 : i64} {
  func.func @_encoder_kernel(%arg0: memref<8x32xf32, #tpu.memory_space<vmem>>, %arg1: memref<8x32xf32, #tpu.memory_space<vmem>>, %arg2: memref<32x40xf32, #tpu.memory_space<vmem>>, %arg3: memref<3x40xf32, #tpu.memory_space<vmem>>, %arg4: memref<40x16xf32, #tpu.memory_space<vmem>>, %arg5: memref<1x16xf32, #tpu.memory_space<vmem>>, %arg6: memref<8x16xf32, #tpu.memory_space<vmem>>) attributes {dimension_semantics = [], scalar_prefetch = 0 : i64, scratch_operands = 0 : i64, tpu.core_type = #tpu.core_type<tc>} {
    %c0 = arith.constant 0 : index
    %c0_0 = arith.constant 0 : index
    %0 = vector.load %arg0[%c0, %c0_0] : memref<8x32xf32, #tpu.memory_space<vmem>>, vector<8x32xf32>
    %c0_1 = arith.constant 0 : index
    %c0_2 = arith.constant 0 : index
    %1 = vector.load %arg1[%c0_1, %c0_2] : memref<8x32xf32, #tpu.memory_space<vmem>>, vector<8x32xf32>
    %cst = arith.constant 5.000000e-01 : f32
    %2 = vector.broadcast %cst : f32 to vector<8x32xf32>
    %3 = arith.cmpf oge, %1, %2 : vector<8x32xf32>
    %cst_3 = arith.constant 2.000000e+00 : f32
    %4 = vector.broadcast %cst_3 : f32 to vector<8x32xf32>
    %5 = arith.mulf %0, %4 : vector<8x32xf32>
    %cst_4 = arith.constant 0.000000e+00 : f32
    %6 = vector.broadcast %cst_4 : f32 to vector<8x32xf32>
    %7 = arith.select %3, %5, %6 : vector<8x32xi1>, vector<8x32xf32>
    %c0_5 = arith.constant 0 : index
    %c0_6 = arith.constant 0 : index
    %8 = vector.load %arg2[%c0_5, %c0_6] : memref<32x40xf32, #tpu.memory_space<vmem>>, vector<32x40xf32>
    %cst_7 = arith.constant dense<0.000000e+00> : vector<8x40xf32>
    %9 = tpu.matmul %7, %8, %cst_7 {dimension_numbers = #tpu.dot_dimension_numbers<[1], [0], [0], [1], [0, 0, 1, 1], [], []>} : vector<8x32xf32>, vector<32x40xf32>, vector<8x40xf32> -> vector<8x40xf32>
    %c0_8 = arith.constant 0 : index
    %c0_9 = arith.constant 0 : index
    %10 = vector.load %arg3[%c0_8, %c0_9] : memref<3x40xf32, #tpu.memory_space<vmem>>, vector<1x40xf32>
    %11 = vector.broadcast %10 : vector<1x40xf32> to vector<8x40xf32>
    %12 = arith.addf %9, %11 : vector<8x40xf32>
    %cst_10 = arith.constant 0.000000e+00 : f32
    %13 = vector.broadcast %cst_10 : f32 to vector<8x40xf32>
    %14 = arith.cmpf oge, %12, %13 : vector<8x40xf32>
    %cst_11 = arith.constant 0.00999999977 : f32
    %15 = vector.broadcast %cst_11 : f32 to vector<8x40xf32>
    %16 = arith.mulf %15, %12 : vector<8x40xf32>
    %17 = arith.select %14, %12, %16 : vector<8x40xi1>, vector<8x40xf32>
    %cst_12 = arith.constant dense<0.000000e+00> : vector<8xf32>
    %18 = vector.multi_reduction <add>, %17, %cst_12 [1] : vector<8x40xf32> to vector<8xf32>
    %19 = vector.shape_cast %18 : vector<8xf32> to vector<8x1xf32>
    %cst_13 = arith.constant 4.000000e+01 : f32
    %20 = vector.broadcast %cst_13 : f32 to vector<8x1xf32>
    %21 = arith.divf %19, %20 : vector<8x1xf32>
    %22 = arith.mulf %17, %17 : vector<8x40xf32>
    %cst_14 = arith.constant dense<0.000000e+00> : vector<8xf32>
    %23 = vector.multi_reduction <add>, %22, %cst_14 [1] : vector<8x40xf32> to vector<8xf32>
    %24 = vector.shape_cast %23 : vector<8xf32> to vector<8x1xf32>
    %cst_15 = arith.constant 4.000000e+01 : f32
    %25 = vector.broadcast %cst_15 : f32 to vector<8x1xf32>
    %26 = arith.divf %24, %25 : vector<8x1xf32>
    %27 = arith.mulf %21, %21 : vector<8x1xf32>
    %28 = arith.subf %26, %27 : vector<8x1xf32>
    %29 = vector.broadcast %21 : vector<8x1xf32> to vector<8x40xf32>
    %30 = arith.subf %17, %29 : vector<8x40xf32>
    %cst_16 = arith.constant 1.000000e-01 : f32
    %31 = vector.broadcast %cst_16 : f32 to vector<8x1xf32>
    %32 = arith.addf %28, %31 : vector<8x1xf32>
    %33 = math.rsqrt %32 : vector<8x1xf32>
    %34 = vector.broadcast %33 : vector<8x1xf32> to vector<8x40xf32>
    %35 = arith.mulf %30, %34 : vector<8x40xf32>
    %c1 = arith.constant 1 : index
    %c0_17 = arith.constant 0 : index
    %36 = vector.load %arg3[%c1, %c0_17] : memref<3x40xf32, #tpu.memory_space<vmem>>, vector<1x40xf32>
    %37 = vector.broadcast %36 : vector<1x40xf32> to vector<8x40xf32>
    %38 = arith.mulf %35, %37 : vector<8x40xf32>
    %c2 = arith.constant 2 : index
    %c0_18 = arith.constant 0 : index
    %39 = vector.load %arg3[%c2, %c0_18] : memref<3x40xf32, #tpu.memory_space<vmem>>, vector<1x40xf32>
    %40 = vector.broadcast %39 : vector<1x40xf32> to vector<8x40xf32>
    %41 = arith.addf %38, %40 : vector<8x40xf32>
    %c0_19 = arith.constant 0 : index
    %c0_20 = arith.constant 0 : index
    %42 = vector.load %arg4[%c0_19, %c0_20] : memref<40x16xf32, #tpu.memory_space<vmem>>, vector<40x16xf32>
    %cst_21 = arith.constant dense<0.000000e+00> : vector<8x16xf32>
    %43 = tpu.matmul %41, %42, %cst_21 {dimension_numbers = #tpu.dot_dimension_numbers<[1], [0], [0], [1], [0, 0, 1, 1], [], []>} : vector<8x40xf32>, vector<40x16xf32>, vector<8x16xf32> -> vector<8x16xf32>
    %c0_22 = arith.constant 0 : index
    %c0_23 = arith.constant 0 : index
    %44 = vector.load %arg5[%c0_22, %c0_23] : memref<1x16xf32, #tpu.memory_space<vmem>>, vector<1x16xf32>
    %45 = vector.broadcast %44 : vector<1x16xf32> to vector<8x16xf32>
    %46 = arith.addf %43, %45 : vector<8x16xf32>
    %c0_24 = arith.constant 0 : index
    %c0_25 = arith.constant 0 : index
    %47 = vector.load %arg6[%c0_24, %c0_25] : memref<8x16xf32, #tpu.memory_space<vmem>>, vector<8x16xf32>
    tpu.vector_store %arg6[%c0_24, %c0_25], %46 {strides = array<i32>} : memref<8x16xf32, #tpu.memory_space<vmem>>, vector<8x16xf32>,
    return
  }
}

</mosaic_0001>

<llo_original>
// kernel: tpu_custom_call.1
$region0: #{tpu_custom_call.1}
  #allocation0 [shape = 'u32[]', space=smem, size = 0x4, offset = 0x4, fixed_abs, tag = 'smem constant byte address 0x4 - core index']
  #allocation1 [shape = 'u32[144,128]{1,0:T(1,128)}', space=vmem, size = 0x12000, scoped, tag = 'internal scratch']
  %s0 = inlined_call_operand.vmem [shape: f32[8,32], index: 0, kind: input, shape index: {}]
  %s1 = inlined_call_operand.vmem [shape: f32[8,32], index: 1, kind: input, shape index: {}]
  %s2 = inlined_call_operand.vmem [shape: f32[32,40], index: 2, kind: input, shape index: {}]
  %s3 = inlined_call_operand.vmem [shape: f32[3,40], index: 3, kind: input, shape index: {}]
  %s4 = inlined_call_operand.vmem [shape: f32[40,16], index: 4, kind: input, shape index: {}]
  %s5 = inlined_call_operand.vmem [shape: f32[1,16], index: 5, kind: input, shape index: {}]
  %s6 = inlined_call_operand.hbm [shape: f32[8,16], index: 6, kind: output, shape index: {}]
  %s7 = sld [smem:[#allocation0]]
  $region34: #{tpu_custom_call.1} parent=0
    _
  %s9 = ssub.s32 1, %s7
  %s10 = scalar_select 0, %s9, %s7
  $region1: #{tpu_custom_call.1} parent=0
    #allocation2 [shape = 'u8[4096]{0}', space=vmem, size = 0x1000, scoped, tag = 'output window, operand 0, single buffered']
    #allocation3 [shape = 's32[1]{0}', space=sflag, size = 0x4, scoped, tag = 'scoped memory for tpu_custom_call.1']
    %11 = vsyncpa [#allocation3], 0
    // Predicated region
    $region2: #{tpu_custom_call.1} parent=1 // pred_check
      _
    $region3: #{tpu_custom_call.1} parent=1 // pred_check_branch
      %13 = sbr.rel (0) target = $region5
    $region4: #{tpu_custom_call.1} parent=1 // pred_region
      _
    $region5: #{tpu_custom_call.1} parent=1 // pred_fallthru
      _
    // Predicated region
    $region6: #{tpu_custom_call.1} parent=1 // pred_check
      _
    $region7: #{tpu_custom_call.1} parent=1 // pred_check_branch
      %15 = sbr.rel (0) target = $region9
    $region8: #{tpu_custom_call.1} parent=1 // pred_region
      _
    $region9: #{tpu_custom_call.1} parent=1 // pred_fallthru
      _
    // Predicated region
    $region10: #{tpu_custom_call.1} parent=1 // pred_check
      _
    $region11: #{tpu_custom_call.1} parent=1 // pred_check_branch
      %17 = sbr.rel (0) target = $region13
    $region12: #{tpu_custom_call.1} parent=1 // pred_region
      _
    $region13: #{tpu_custom_call.1} parent=1 // pred_fallthru
      _
    // Predicated region
    $region14: #{tpu_custom_call.1} parent=1 // pred_check
      _
    $region15: #{tpu_custom_call.1} parent=1 // pred_check_branch
      %19 = sbr.rel (0) target = $region17
    $region16: #{tpu_custom_call.1} parent=1 // pred_region
      _
    $region17: #{tpu_custom_call.1} parent=1 // pred_fallthru
      _
    // Predicated region
    $region18: #{tpu_custom_call.1} parent=1 // pred_check
      _
    $region19: #{tpu_custom_call.1} parent=1 // pred_check_branch
      %21 = sbr.rel (0) target = $region21
    $region20: #{tpu_custom_call.1} parent=1 // pred_region
      _
    $region21: #{tpu_custom_call.1} parent=1 // pred_fallthru
      _
    // Predicated region
    $region22: #{tpu_custom_call.1} parent=1 // pred_check
      _
    $region23: #{tpu_custom_call.1} parent=1 // pred_check_branch
      %23 = sbr.rel (0) target = $region25
    $region24: #{tpu_custom_call.1} parent=1 // pred_region
      _
    $region25: #{tpu_custom_call.1} parent=1 // pred_fallthru
      _
    %v24 = vld [vmem:[%s0] sm:$0xff]
    %v25 = vld [vmem:[%s1] sm:$0xff]
    %vm26 = vcmp.ge.f32.partialorder %v25, 0.5
    %v27 = vmul.f32 %v24, 2.0
    %v28 = vsel %vm26, %v27, 0.0
    %v29 = vld [vmem:[%s2] sm:$0xff]
    %v30 = vld [vmem:[%s2 + $0x8] sm:$0xff]
    %v31 = vld [vmem:[%s2 + $0x10] sm:$0xff]
    %v32 = vld [vmem:[%s2 + $0x18] sm:$0xff]
    %v33 = vld [vmem:[%s3] sm:$0x1]
    %v34 = vlaneseq
    %v35 = vshrl.u32 %v34, 7
    %v36 = vsub.s32 0, %v35
    %v37 = vrot.slane %v33, %v36
    %vm38 = vcmask 261120
    %v40 = vsel %vm38, %v28, 0
    %42 = vmatprep.subr.mxu0 0.0
    %43 = vmatpush1.msra.mxu0 0.0
    %44 = vmatprep.subr.mxu0 0.0
    %45 = vmatpush1.msra.mxu0 0.0
    %46 = vmatprep.subr.mxu0 0.0
    %47 = vmatpush1.msra.mxu0 0.0
    %48 = vmatprep.subr.mxu0 0.0
    %49 = vmatpush1.msra.mxu0 0.0
    %50 = vmatprep.subr.mxu0 0.0
    %51 = vmatpush1.msra.mxu0 0.0
    %52 = vmatprep.subr.mxu0 0.0
    %53 = vmatpush1.msra.mxu0 0.0
    %54 = vmatprep.subr.mxu0 0.0
    %55 = vmatpush1.msra.mxu0 0.0
    %56 = vmatprep.subr.mxu0 0.0
    %57 = vmatpush1.msra.mxu0 0.0
    %58 = vmatprep.subr.mxu0 0.0
    %59 = vmatpush1.msra.mxu0 0.0
    %60 = vmatprep.subr.mxu0 0.0
    %61 = vmatpush1.msra.mxu0 0.0
    %62 = vmatprep.subr.mxu0 0.0
    %63 = vmatpush1.msra.mxu0 0.0
    %64 = vmatprep.subr.mxu0 0.0
    %65 = vmatpush1.msra.mxu0 0.0
    %66 = vmatprep.subr.mxu0 0.0
    %67 = vmatpush1.msra.mxu0 %v32
    %68 = vmatprep.subr.mxu0 0.0
    %69 = vmatpush1.msra.mxu0 %v31
    %70 = vmatprep.subr.mxu0 0.0
    %71 = vmatpush1.msra.mxu0 %v30
    %72 = vmatprep.subr.mxu0 0.0
    %73 = vmatpush1.msra.mxu0 %v29
    %74 = vmatprep.subr.mxu0 0.0
    %75 = vmatpush2.msra.mxu0 0.0
    %76 = vmatprep.subr.mxu0 0.0
    %77 = vmatpush2.msra.mxu0 0.0
    %78 = vmatprep.subr.mxu0 0.0
    %79 = vmatpush2.msra.mxu0 0.0
    %80 = vmatprep.subr.mxu0 0.0
    %81 = vmatpush2.msra.mxu0 0.0
    %82 = vmatprep.subr.mxu0 0.0
    %83 = vmatpush2.msra.mxu0 0.0
    %84 = vmatprep.subr.mxu0 0.0
    %85 = vmatpush2.msra.mxu0 0.0
    %86 = vmatprep.subr.mxu0 0.0
    %87 = vmatpush2.msra.mxu0 0.0
    %88 = vmatprep.subr.mxu0 0.0
    %89 = vmatpush2.msra.mxu0 0.0
    %90 = vmatprep.subr.mxu0 0.0
    %91 = vmatpush2.msra.mxu0 0.0
    %92 = vmatprep.subr.mxu0 0.0
    %93 = vmatpush2.msra.mxu0 0.0
    %94 = vmatprep.subr.mxu0 0.0
    %95 = vmatpush2.msra.mxu0 0.0
    %96 = vmatprep.subr.mxu0 0.0
    %97 = vmatpush2.msra.mxu0 0.0
    %98 = vmatprep.subr.mxu0 0.0
    %99 = vmatpush2.msra.mxu0 0.0
    %100 = vmatprep.subr.mxu0 0.0
    %101 = vmatpush2.msra.mxu0 0.0
    %102 = vmatprep.subr.mxu0 0.0
    %103 = vmatpush2.msra.mxu0 0.0
    %104 = vmatprep.subr.mxu0 0.0
    %105 = vmatpush2.msra.mxu0 0.0
    %106 = vmatprep.mubr.f32.mxu0 0.0
    %107 = vmatmul.mubr.f32.gmra.mxu0 %v40
    %v108 = vpop.f32.mrf.mxu0
    %v109 = vadd.f32 %v37, %v108
    %v110 = vpop.f32.mrf.mxu0
    %111 = vdwg.mxu0
    %vm112 = vcmp.ge.f32.partialorder %v109, 0.0
    %v113 = vmul.f32 %v109, 0.01
    %v114 = vsel %vm112, %v109, %v113
    %vm115 = vcmask 326656
    %v116 = vsel %vm115, %v114, 0.0
    %117 = vadd.xlane.f32.xlu0 %v116
    %v118 = vpop.xlane.xlu0 %117
    %v119 = vrcp.pop 40.0
    %v120 = vmul.f32 %v118, %v119
    %v121 = vmul.f32 %v114, %v114
    %v122 = vsel %vm115, %v121, 0.0
    %123 = vadd.xlane.f32.xlu0 %v122
    %v124 = vpop.xlane.xlu0 %123
    %v125 = vmul.f32 %v124, %v119
    %v126 = vmul.f32 %v120, %v120
    %v127 = vsub.f32 %v125, %v126
    %v128 = vsub.f32 %v114, %v120
    %v129 = vadd.f32 %v127, 0.1
    %v130 = vrsqrt.pop %v129
    %v131 = vmul.f32 %v128, %v130
    %v132 = vld [vmem:[%s3 + $0x1] sm:$0x1]
    %v133 = vlaneseq
    %v134 = vshrl.u32 %v133, 7
    %v135 = vsub.s32 0, %v134
    %v136 = vrot.slane %v132, %v135
    %v137 = vmul.f32 %v131, %v136
    %v138 = vld [vmem:[%s3 + $0x2] sm:$0x1]
    %v139 = vlaneseq
    %v140 = vshrl.u32 %v139, 7
    %v141 = vsub.s32 0, %v140
    %v142 = vrot.slane %v138, %v141
    %v143 = vadd.f32 %v137, %v142
    %v144 = vld [vmem:[%s4] sm:$0xff]
    %v145 = vld [vmem:[%s4 + $0x8] sm:$0xff]
    %v146 = vld [vmem:[%s4 + $0x10] sm:$0xff]
    %v147 = vld [vmem:[%s4 + $0x18] sm:$0xff]
    %v148 = vld [vmem:[%s4 + $0x20] sm:$0xff]
    %v149 = vld [vmem:[%s5] sm:$0x1]
    %v151 = vlaneseq
    %v152 = vshrl.u32 %v151, 7
    %v153 = vsub.s32 0, %v152
    %v154 = vrot.slane %v149, %v153
    %v157 = vsel %vm115, %v143, 0
    %159 = vmatprep.subr.mxu0 0.0
    %160 = vmatpush1.msra.mxu0 0.0
    %161 = vmatprep.subr.mxu0 0.0
    %162 = vmatpush1.msra.mxu0 0.0
    %163 = vmatprep.subr.mxu0 0.0
    %164 = vmatpush1.msra.mxu0 0.0
    %165 = vmatprep.subr.mxu0 0.0
    %166 = vmatpush1.msra.mxu0 0.0
    %167 = vmatprep.subr.mxu0 0.0
    %168 = vmatpush1.msra.mxu0 0.0
    %169 = vmatprep.subr.mxu0 0.0
    %170 = vmatpush1.msra.mxu0 0.0
    %171 = vmatprep.subr.mxu0 0.0
    %172 = vmatpush1.msra.mxu0 0.0
    %173 = vmatprep.subr.mxu0 0.0
    %174 = vmatpush1.msra.mxu0 0.0
    %175 = vmatprep.subr.mxu0 0.0
    %176 = vmatpush1.msra.mxu0 0.0
    %177 = vmatprep.subr.mxu0 0.0
    %178 = vmatpush1.msra.mxu0 0.0
    %179 = vmatprep.subr.mxu0 0.0
    %180 = vmatpush1.msra.mxu0 0.0
    %181 = vmatprep.subr.mxu0 0.0
    %182 = vmatpush1.msra.mxu0 %v148
    %183 = vmatprep.subr.mxu0 0.0
    %184 = vmatpush1.msra.mxu0 %v147
    %185 = vmatprep.subr.mxu0 0.0
    %186 = vmatpush1.msra.mxu0 %v146
    %187 = vmatprep.subr.mxu0 0.0
    %188 = vmatpush1.msra.mxu0 %v145
    %189 = vmatprep.subr.mxu0 0.0
    %190 = vmatpush1.msra.mxu0 %v144
    %191 = vmatprep.subr.mxu0 0.0
    %192 = vmatpush2.msra.mxu0 0.0
    %193 = vmatprep.subr.mxu0 0.0
    %194 = vmatpush2.msra.mxu0 0.0
    %195 = vmatprep.subr.mxu0 0.0
    %196 = vmatpush2.msra.mxu0 0.0
    %197 = vmatprep.subr.mxu0 0.0
    %198 = vmatpush2.msra.mxu0 0.0
    %199 = vmatprep.subr.mxu0 0.0
    %200 = vmatpush2.msra.mxu0 0.0
    %201 = vmatprep.subr.mxu0 0.0
    %202 = vmatpush2.msra.mxu0 0.0
    %203 = vmatprep.subr.mxu0 0.0
    %204 = vmatpush2.msra.mxu0 0.0
    %205 = vmatprep.subr.mxu0 0.0
    %206 = vmatpush2.msra.mxu0 0.0
    %207 = vmatprep.subr.mxu0 0.0
    %208 = vmatpush2.msra.mxu0 0.0
    %209 = vmatprep.subr.mxu0 0.0
    %210 = vmatpush2.msra.mxu0 0.0
    %211 = vmatprep.subr.mxu0 0.0
    %212 = vmatpush2.msra.mxu0 0.0
    %213 = vmatprep.subr.mxu0 0.0
    %214 = vmatpush2.msra.mxu0 0.0
    %215 = vmatprep.subr.mxu0 0.0
    %216 = vmatpush2.msra.mxu0 0.0
    %217 = vmatprep.subr.mxu0 0.0
    %218 = vmatpush2.msra.mxu0 0.0
    %219 = vmatprep.subr.mxu0 0.0
    %220 = vmatpush2.msra.mxu0 0.0
    %221 = vmatprep.subr.mxu0 0.0
    %222 = vmatpush2.msra.mxu0 0.0
    %223 = vmatprep.mubr.f32.mxu0 0.0
    %224 = vmatmul.mubr.f32.gmra.mxu0 %v157
    %v225 = vpop.f32.mrf.mxu0
    %v226 = vadd.f32 %v154, %v225
    %v227 = vpop.f32.mrf.mxu0
    %228 = vdwg.mxu0
    %vm229 = vcmask 130048
    %230 = vst.msk [vmem:[#allocation2] sm:$0xff] %vm229, %v226
    // Predicated region
    $region26: #{tpu_custom_call.1} parent=1 // pred_check
      _
    $region27: #{tpu_custom_call.1} parent=1 // pred_check_branch
      %232 = sbr.rel (0) target = $region29
    $region28: #{tpu_custom_call.1} parent=1 // pred_region
      %s234 = ssub.s32 128, 128
      %235 = vsyncadd [#allocation3], %s234
      %s237 = sshll.u32 [#allocation2], 4
      %s238 = int_to_ptr.vmem [resolvable:$true] %s237
      %240 = dma.vmem_to_hbm [thread:$0]  %s238, 128, %s6, [#allocation3]
    $region29: #{tpu_custom_call.1} parent=1 // pred_fallthru
      _
    // Predicated region
    $region30: #{tpu_custom_call.1} parent=1 // pred_check
      _
    $region31: #{tpu_custom_call.1} parent=1 // pred_check_branch
      %242 = sbr.rel (0) target = $region33
    $region32: #{tpu_custom_call.1} parent=1 // pred_region
      %243 = dma.done [#allocation3], 128
    $region33: #{tpu_custom_call.1} parent=1 // pred_fallthru
      _
    %244 = vsyncpa [#allocation3], 1

</llo_original>
